<compile_context>
chip_gen: v7x
topology: tpu7x:2x2x1
jax: 0.10.0
libtpu: 0.0.40
codegen_flags: <defaults>
</compile_context>

<pallas_src>
import jax
import jax.numpy as jnp
from jax.experimental import pallas as pl
from jax.experimental.pallas import tpu as pltpu


def _cloudmask_kernel(x_ref, lhs_ref, rhs_ref, w_ref, b_ref, gt_ref,
                      out_ref, loss_ref):
    """One grid step = one (batch, row-tile) of the decompressed plane.

    x_ref   : (1, C, rpc, cpc)    bf16  compressed input (all channels)
    lhs_ref : (row_tile, rpc)     bf16  row slice of left decompression matrix
    rhs_ref : (cpc, CPIX)         bf16  right decompression matrix
    w_ref   : (C,)                f32   1x1-conv weight (SMEM)
    b_ref   : (1,)                f32   conv bias       (SMEM)
    gt_ref  : (1, row_tile, CPIX) f32   ground-truth mask tile
    out_ref : (1, row_tile, CPIX) f32   sigmoid cloud-mask probabilities
    loss_ref: (1, 1, 1, 1)        f32   per-(batch, row-tile) BCE partial sum
    """
    nch = x_ref.shape[1]

    # ---- fold the 1x1 conv through the linear decompression ----------------
    #   sum_c w[c] * (lhs @ x_c @ rhs) == lhs @ (sum_c w[c] * x_c) @ rhs
    # Tiny (rpc, cpc) weighted sum on the VPU (static unroll, C = 9).
    xw = w_ref[0] * x_ref[0, 0].astype(jnp.float32)
    for c in range(1, nch):
        xw = xw + w_ref[c] * x_ref[0, c].astype(jnp.float32)
    xw = xw.astype(jnp.bfloat16)                              # (rpc, cpc)

    # ---- single bf16 decompression matmul pair on the MXU ------------------
    tmp = jnp.dot(lhs_ref[...], xw,
                  preferred_element_type=jnp.float32).astype(jnp.bfloat16)
    logits = jnp.dot(tmp, rhs_ref[...],
                     preferred_element_type=jnp.float32)      # (row_tile, CPIX)
    logits = logits + b_ref[0]

    prob = jax.nn.sigmoid(logits)                             # EUP
    out_ref[0] = prob.astype(out_ref.dtype)

    # ---- BCE from logits (stable softplus), torch-style clamp --------------
    # For binary gt:
    #   min(softplus(-z) + (1-gt)*z, 100) == -max(log p, -100)     (gt = 1)
    #                                     == -max(log(1-p), -100)  (gt = 0)
    gt = gt_ref[0]
    z = logits
    softplus_neg_z = jnp.maximum(-z, 0.0) + jnp.log(1.0 + jnp.exp(-jnp.abs(z)))
    bce = jnp.minimum(softplus_neg_z + (1.0 - gt) * z, 100.0)
    loss_ref[0, 0] = jnp.sum(bce, keepdims=True)              # (1, 1) partial sum


def cloudmask_compress_forward(x, gt, lhs, rhs, conv_w, conv_b, *, row_tile=None):
    """Pallas wrapper.  Returns (out, loss) like CloudMaskCompress.forward.

    x      : (B, C, rpc, cpc)   bf16 compressed multi-channel image (NCHW)
    gt     : (B, 1, RPIX, CPIX) f32  ground-truth mask
    lhs    : (RPIX, rpc) bf16,  rhs: (cpc, CPIX) bf16
    conv_w : (C,) f32,  conv_b: (1,) f32  (stand-in internal-model params)
    """
    B, C, rpc, cpc = x.shape
    RPIX = lhs.shape[0]
    CPIX = rhs.shape[1]

    # Row-tile the output plane so per-step VMEM stays bounded at production
    # SLSTR sizes (v7x: 64 MiB physical VMEM).  Toy shapes use a single tile.
    if row_tile is None:
        row_tile = min(RPIX, 512)
    assert RPIX % row_tile == 0, "RPIX must be a multiple of row_tile"
    n_rt = RPIX // row_tile

    gt_flat = gt.reshape(B, RPIX, CPIX)   # drop singleton channel (free, XLA side)

    grid_spec = pltpu.PrefetchScalarGridSpec(
        num_scalar_prefetch=0,
        grid=(B, n_rt),
        in_specs=[
            pl.BlockSpec((1, C, rpc, cpc), lambda b, r: (b, 0, 0, 0)),   # x
            pl.BlockSpec((row_tile, rpc), lambda b, r: (r, 0)),          # lhs (row slice)
            pl.BlockSpec((cpc, CPIX), lambda b, r: (0, 0)),              # rhs
            pl.BlockSpec(memory_space=pltpu.MemorySpace.SMEM),           # conv_w
            pl.BlockSpec(memory_space=pltpu.MemorySpace.SMEM),           # conv_b
            pl.BlockSpec((1, row_tile, CPIX), lambda b, r: (b, r, 0)),   # gt
        ],
        out_specs=[
            pl.BlockSpec((1, row_tile, CPIX), lambda b, r: (b, r, 0)),   # out
            pl.BlockSpec((1, 1, 1, 1), lambda b, r: (b, r, 0, 0)),       # loss partials
        ],
    )

    out_flat, loss_part = pl.pallas_call(
        _cloudmask_kernel,
        out_shape=(
            jax.ShapeDtypeStruct((B, RPIX, CPIX), jnp.float32),
            jax.ShapeDtypeStruct((B, n_rt, 1, 1), jnp.float32),
        ),
        grid_spec=grid_spec,
        compiler_params=pltpu.CompilerParams(
            # No cross-step accumulator remains -> every (batch, row-tile) is
            # independent and can shard across TensorCores (v7x megacore).
            dimension_semantics=("parallel", "parallel"),
            # Headroom for larger (production) row tiles; toy shapes need far less.
            vmem_limit_bytes=64 * 1024 * 1024,
        ),
    )(x, lhs, rhs, conv_w, conv_b, gt_flat)

    out = out_flat.reshape(B, 1, RPIX, CPIX)
    # BCELoss mean reduction over out.numel() = B * 1 * RPIX * CPIX elements.
    loss = jnp.sum(loss_part) / (B * RPIX * CPIX)
    return out, loss


if __name__ == "__main__":
    # Small shapes consistent with the module: TRAIN_SIZE = B = 2, nchannels = 9,
    # compressed (8, 32) -> decompressed (RPIX, CPIX) = (16, 128).
    # CPIX is a multiple of 128 so out/gt blocks are lane-dense.
    B, NCH = 2, 9
    RPC, CPC = 8, 32
    RPIX, CPIX = 16, 128

    key = jax.random.PRNGKey(0)
    kx, kl, kr, kw, kg = jax.random.split(key, 5)

    # Compressed multi-channel input (NCHW), bf16 as in the SambaNova module.
    x = jax.random.normal(kx, (B, NCH, RPC, CPC), dtype=jnp.float32).astype(jnp.bfloat16)

    # Deterministic decompression matrices (stand-in for get_lhs_rhs_decompress).
    lhs = (jax.random.normal(kl, (RPIX, RPC), dtype=jnp.float32) / RPC).astype(jnp.bfloat16)
    rhs = (jax.random.normal(kr, (CPC, CPIX), dtype=jnp.float32) / CPC).astype(jnp.bfloat16)

    # Internal-model (1x1 conv) parameters.
    conv_w = jax.random.normal(kw, (NCH,), dtype=jnp.float32) * 0.1
    conv_b = jnp.zeros((1,), dtype=jnp.float32)

    # Binary ground-truth cloud mask.
    gt = jax.random.bernoulli(kg, p=0.5, shape=(B, 1, RPIX, CPIX)).astype(jnp.float32)

    out, loss = cloudmask_compress_forward(x, gt, lhs, rhs, conv_w, conv_b)
    out = jax.block_until_ready(out)
    loss = jax.block_until_ready(loss)

    assert out.shape == (B, 1, RPIX, CPIX)
    assert bool(jnp.all(jnp.isfinite(out)))
    assert bool(jnp.isfinite(loss))
    print("KERNEL_OK")
</pallas_src>

<mosaic_0001>
module attributes {stable_mosaic.version = 11 : i64} {
  func.func @_cloudmask_kernel(%arg0: i32, %arg1: i32, %arg2: memref<1x9x8x32xbf16, #tpu.memory_space<vmem>>, %arg3: memref<16x8xbf16, #tpu.memory_space<vmem>>, %arg4: memref<32x128xbf16, #tpu.memory_space<vmem>>, %arg5: memref<9xf32, #tpu.memory_space<smem>>, %arg6: memref<1xf32, #tpu.memory_space<smem>>, %arg7: memref<1x16x128xf32, #tpu.memory_space<vmem>>, %arg8: memref<1x16x128xf32, #tpu.memory_space<vmem>>, %arg9: memref<1x1x1x1xf32, #tpu.memory_space<vmem>>) attributes {dimension_semantics = [#tpu.dimension_semantics<parallel>, #tpu.dimension_semantics<parallel>], iteration_bounds = array<i64: 2, 1>, scalar_prefetch = 0 : i64, scratch_operands = 0 : i64, tpu.core_type = #tpu.core_type<tc>, window_params = [{transform_indices = @transform_0, window_bounds = array<i64: 1, 9, 8, 32>}, {transform_indices = @transform_1, window_bounds = array<i64: 16, 8>}, {pipeline_mode = #tpu.pipeline_mode<synchronous>, transform_indices = @transform_2, window_bounds = array<i64: 32, 128>}, {transform_indices = @transform_3, window_bounds = array<i64: 9>}, {transform_indices = @transform_4, window_bounds = array<i64: 1>}, {transform_indices = @transform_5, window_bounds = array<i64: 1, 16, 128>}, {transform_indices = @transform_6, window_bounds = array<i64: 1, 16, 128>}, {transform_indices = @transform_7, window_bounds = array<i64: 1, 1, 1, 1>}]} {
    %c0 = arith.constant 0 : index
    %0 = memref.load %arg5[%c0] : memref<9xf32, #tpu.memory_space<smem>>
    %c0_0 = arith.constant 0 : index
    %c0_1 = arith.constant 0 : index
    %c0_2 = arith.constant 0 : index
    %c0_3 = arith.constant 0 : index
    %1 = vector.load %arg2[%c0_0, %c0_1, %c0_2, %c0_3] : memref<1x9x8x32xbf16, #tpu.memory_space<vmem>>, vector<1x1x8x32xbf16>
    %2 = vector.shape_cast %1 : vector<1x1x8x32xbf16> to vector<8x32xbf16>
    %3 = arith.extf %2 : vector<8x32xbf16> to vector<8x32xf32>
    %4 = vector.broadcast %0 : f32 to vector<8x32xf32>
    %5 = arith.mulf %4, %3 : vector<8x32xf32>
    %c1 = arith.constant 1 : index
    %6 = memref.load %arg5[%c1] : memref<9xf32, #tpu.memory_space<smem>>
    %c0_4 = arith.constant 0 : index
    %c1_5 = arith.constant 1 : index
    %c0_6 = arith.constant 0 : index
    %c0_7 = arith.constant 0 : index
    %7 = vector.load %arg2[%c0_4, %c1_5, %c0_6, %c0_7] : memref<1x9x8x32xbf16, #tpu.memory_space<vmem>>, vector<1x1x8x32xbf16>
    %8 = vector.shape_cast %7 : vector<1x1x8x32xbf16> to vector<8x32xbf16>
    %9 = arith.extf %8 : vector<8x32xbf16> to vector<8x32xf32>
    %10 = vector.broadcast %6 : f32 to vector<8x32xf32>
    %11 = arith.mulf %10, %9 : vector<8x32xf32>
    %12 = arith.addf %5, %11 : vector<8x32xf32>
    %c2 = arith.constant 2 : index
    %13 = memref.load %arg5[%c2] : memref<9xf32, #tpu.memory_space<smem>>
    %c0_8 = arith.constant 0 : index
    %c2_9 = arith.constant 2 : index
    %c0_10 = arith.constant 0 : index
    %c0_11 = arith.constant 0 : index
    %14 = vector.load %arg2[%c0_8, %c2_9, %c0_10, %c0_11] : memref<1x9x8x32xbf16, #tpu.memory_space<vmem>>, vector<1x1x8x32xbf16>
    %15 = vector.shape_cast %14 : vector<1x1x8x32xbf16> to vector<8x32xbf16>
    %16 = arith.extf %15 : vector<8x32xbf16> to vector<8x32xf32>
    %17 = vector.broadcast %13 : f32 to vector<8x32xf32>
    %18 = arith.mulf %17, %16 : vector<8x32xf32>
    %19 = arith.addf %12, %18 : vector<8x32xf32>
    %c3 = arith.constant 3 : index
    %20 = memref.load %arg5[%c3] : memref<9xf32, #tpu.memory_space<smem>>
    %c0_12 = arith.constant 0 : index
    %c3_13 = arith.constant 3 : index
    %c0_14 = arith.constant 0 : index
    %c0_15 = arith.constant 0 : index
    %21 = vector.load %arg2[%c0_12, %c3_13, %c0_14, %c0_15] : memref<1x9x8x32xbf16, #tpu.memory_space<vmem>>, vector<1x1x8x32xbf16>
    %22 = vector.shape_cast %21 : vector<1x1x8x32xbf16> to vector<8x32xbf16>
    %23 = arith.extf %22 : vector<8x32xbf16> to vector<8x32xf32>
    %24 = vector.broadcast %20 : f32 to vector<8x32xf32>
    %25 = arith.mulf %24, %23 : vector<8x32xf32>
    %26 = arith.addf %19, %25 : vector<8x32xf32>
    %c4 = arith.constant 4 : index
    %27 = memref.load %arg5[%c4] : memref<9xf32, #tpu.memory_space<smem>>
    %c0_16 = arith.constant 0 : index
    %c4_17 = arith.constant 4 : index
    %c0_18 = arith.constant 0 : index
    %c0_19 = arith.constant 0 : index
    %28 = vector.load %arg2[%c0_16, %c4_17, %c0_18, %c0_19] : memref<1x9x8x32xbf16, #tpu.memory_space<vmem>>, vector<1x1x8x32xbf16>
    %29 = vector.shape_cast %28 : vector<1x1x8x32xbf16> to vector<8x32xbf16>
    %30 = arith.extf %29 : vector<8x32xbf16> to vector<8x32xf32>
    %31 = vector.broadcast %27 : f32 to vector<8x32xf32>
    %32 = arith.mulf %31, %30 : vector<8x32xf32>
    %33 = arith.addf %26, %32 : vector<8x32xf32>
    %c5 = arith.constant 5 : index
    %34 = memref.load %arg5[%c5] : memref<9xf32, #tpu.memory_space<smem>>
    %c0_20 = arith.constant 0 : index
    %c5_21 = arith.constant 5 : index
    %c0_22 = arith.constant 0 : index
    %c0_23 = arith.constant 0 : index
    %35 = vector.load %arg2[%c0_20, %c5_21, %c0_22, %c0_23] : memref<1x9x8x32xbf16, #tpu.memory_space<vmem>>, vector<1x1x8x32xbf16>
    %36 = vector.shape_cast %35 : vector<1x1x8x32xbf16> to vector<8x32xbf16>
    %37 = arith.extf %36 : vector<8x32xbf16> to vector<8x32xf32>
    %38 = vector.broadcast %34 : f32 to vector<8x32xf32>
    %39 = arith.mulf %38, %37 : vector<8x32xf32>
    %40 = arith.addf %33, %39 : vector<8x32xf32>
    %c6 = arith.constant 6 : index
    %41 = memref.load %arg5[%c6] : memref<9xf32, #tpu.memory_space<smem>>
    %c0_24 = arith.constant 0 : index
    %c6_25 = arith.constant 6 : index
    %c0_26 = arith.constant 0 : index
    %c0_27 = arith.constant 0 : index
    %42 = vector.load %arg2[%c0_24, %c6_25, %c0_26, %c0_27] : memref<1x9x8x32xbf16, #tpu.memory_space<vmem>>, vector<1x1x8x32xbf16>
    %43 = vector.shape_cast %42 : vector<1x1x8x32xbf16> to vector<8x32xbf16>
    %44 = arith.extf %43 : vector<8x32xbf16> to vector<8x32xf32>
    %45 = vector.broadcast %41 : f32 to vector<8x32xf32>
    %46 = arith.mulf %45, %44 : vector<8x32xf32>
    %47 = arith.addf %40, %46 : vector<8x32xf32>
    %c7 = arith.constant 7 : index
    %48 = memref.load %arg5[%c7] : memref<9xf32, #tpu.memory_space<smem>>
    %c0_28 = arith.constant 0 : index
    %c7_29 = arith.constant 7 : index
    %c0_30 = arith.constant 0 : index
    %c0_31 = arith.constant 0 : index
    %49 = vector.load %arg2[%c0_28, %c7_29, %c0_30, %c0_31] : memref<1x9x8x32xbf16, #tpu.memory_space<vmem>>, vector<1x1x8x32xbf16>
    %50 = vector.shape_cast %49 : vector<1x1x8x32xbf16> to vector<8x32xbf16>
    %51 = arith.extf %50 : vector<8x32xbf16> to vector<8x32xf32>
    %52 = vector.broadcast %48 : f32 to vector<8x32xf32>
    %53 = arith.mulf %52, %51 : vector<8x32xf32>
    %54 = arith.addf %47, %53 : vector<8x32xf32>
    %c8 = arith.constant 8 : index
    %55 = memref.load %arg5[%c8] : memref<9xf32, #tpu.memory_space<smem>>
    %c0_32 = arith.constant 0 : index
    %c8_33 = arith.constant 8 : index
    %c0_34 = arith.constant 0 : index
    %c0_35 = arith.constant 0 : index
    %56 = vector.load %arg2[%c0_32, %c8_33, %c0_34, %c0_35] : memref<1x9x8x32xbf16, #tpu.memory_space<vmem>>, vector<1x1x8x32xbf16>
    %57 = vector.shape_cast %56 : vector<1x1x8x32xbf16> to vector<8x32xbf16>
    %58 = arith.extf %57 : vector<8x32xbf16> to vector<8x32xf32>
    %59 = vector.broadcast %55 : f32 to vector<8x32xf32>
    %60 = arith.mulf %59, %58 : vector<8x32xf32>
    %61 = arith.addf %54, %60 : vector<8x32xf32>
    %62 = arith.truncf %61 : vector<8x32xf32> to vector<8x32xbf16>
    %c0_36 = arith.constant 0 : index
    %c0_37 = arith.constant 0 : index
    %63 = vector.load %arg3[%c0_36, %c0_37] : memref<16x8xbf16, #tpu.memory_space<vmem>>, vector<16x8xbf16>
    %cst = arith.constant dense<0.000000e+00> : vector<16x32xf32>
    %64 = tpu.matmul %63, %62, %cst {dimension_numbers = #tpu.dot_dimension_numbers<[1], [0], [0], [1], [0, 0, 1, 1], [], []>} : vector<16x8xbf16>, vector<8x32xbf16>, vector<16x32xf32> -> vector<16x32xf32>
    %65 = arith.truncf %64 : vector<16x32xf32> to vector<16x32xbf16>
    %c0_38 = arith.constant 0 : index
    %c0_39 = arith.constant 0 : index
    %66 = vector.load %arg4[%c0_38, %c0_39] : memref<32x128xbf16, #tpu.memory_space<vmem>>, vector<32x128xbf16>
    %cst_40 = arith.constant dense<0.000000e+00> : vector<16x128xf32>
    %67 = tpu.matmul %65, %66, %cst_40 {dimension_numbers = #tpu.dot_dimension_numbers<[1], [0], [0], [1], [0, 0, 1, 1], [], []>} : vector<16x32xbf16>, vector<32x128xbf16>, vector<16x128xf32> -> vector<16x128xf32>
    %c0_41 = arith.constant 0 : index
    %68 = memref.load %arg6[%c0_41] : memref<1xf32, #tpu.memory_space<smem>>
    %69 = vector.broadcast %68 : f32 to vector<16x128xf32>
    %70 = arith.addf %67, %69 : vector<16x128xf32>
    %71 = arith.negf %70 : vector<16x128xf32>
    %72 = math.exp %71 : vector<16x128xf32>
    %cst_42 = arith.constant 1.000000e+00 : f32
    %73 = vector.broadcast %cst_42 : f32 to vector<16x128xf32>
    %74 = arith.addf %73, %72 : vector<16x128xf32>
    %75 = arith.divf %73, %74 : vector<16x128xf32>
    %c0_43 = arith.constant 0 : index
    %c0_44 = arith.constant 0 : index
    %c0_45 = arith.constant 0 : index
    %76 = vector.load %arg8[%c0_43, %c0_44, %c0_45] : memref<1x16x128xf32, #tpu.memory_space<vmem>>, vector<1x16x128xf32>
    %77 = vector.shape_cast %76 : vector<1x16x128xf32> to vector<16x128xf32>
    %78 = vector.shape_cast %75 : vector<16x128xf32> to vector<1x16x128xf32>
    tpu.vector_store %arg8[%c0_43, %c0_44, %c0_45], %78 {strides = array<i32>} : memref<1x16x128xf32, #tpu.memory_space<vmem>>, vector<1x16x128xf32>,
    %c0_46 = arith.constant 0 : index
    %c0_47 = arith.constant 0 : index
    %c0_48 = arith.constant 0 : index
    %79 = vector.load %arg7[%c0_46, %c0_47, %c0_48] : memref<1x16x128xf32, #tpu.memory_space<vmem>>, vector<1x16x128xf32>
    %80 = vector.shape_cast %79 : vector<1x16x128xf32> to vector<16x128xf32>
    %cst_49 = arith.constant 0.000000e+00 : f32
    %81 = vector.broadcast %cst_49 : f32 to vector<16x128xf32>
    %82 = arith.subf %81, %70 : vector<16x128xf32>
    %cst_50 = arith.constant 0.000000e+00 : f32
    %83 = vector.broadcast %cst_50 : f32 to vector<16x128xf32>
    %84 = arith.maximumf %82, %83 : vector<16x128xf32>
    %85 = math.absf %70 : vector<16x128xf32>
    %cst_51 = arith.constant 0.000000e+00 : f32
    %86 = vector.broadcast %cst_51 : f32 to vector<16x128xf32>
    %87 = arith.subf %86, %85 : vector<16x128xf32>
    %88 = math.exp %87 : vector<16x128xf32>
    %cst_52 = arith.constant 1.000000e+00 : f32
    %89 = vector.broadcast %cst_52 : f32 to vector<16x128xf32>
    %90 = arith.addf %89, %88 : vector<16x128xf32>
    %91 = math.log %90 : vector<16x128xf32>
    %92 = arith.addf %84, %91 : vector<16x128xf32>
    %cst_53 = arith.constant 1.000000e+00 : f32
    %93 = vector.broadcast %cst_53 : f32 to vector<16x128xf32>
    %94 = arith.subf %93, %80 : vector<16x128xf32>
    %95 = arith.mulf %94, %70 : vector<16x128xf32>
    %96 = arith.addf %92, %95 : vector<16x128xf32>
    %cst_54 = arith.constant 1.000000e+02 : f32
    %97 = vector.broadcast %cst_54 : f32 to vector<16x128xf32>
    %98 = arith.minimumf %96, %97 : vector<16x128xf32>
    %99 = vector.shape_cast %98 : vector<16x128xf32> to vector<1x16x128xf32>
    %cst_55 = arith.constant dense<0.000000e+00> : vector<1xf32>
    %100 = vector.multi_reduction <add>, %99, %cst_55 [1, 2] : vector<1x16x128xf32> to vector<1xf32>
    %101 = vector.shape_cast %100 : vector<1xf32> to vector<1x1x1xf32>
    %102 = vector.extract %101[0, 0, 0] : f32 from vector<1x1x1xf32>
    %103 = vector.broadcast %102 : f32 to vector<1x1xf32>
    %c0_56 = arith.constant 0 : index
    %c0_57 = arith.constant 0 : index
    %c0_58 = arith.constant 0 : index
    %c0_59 = arith.constant 0 : index
    %104 = vector.load %arg9[%c0_56, %c0_57, %c0_58, %c0_59] : memref<1x1x1x1xf32, #tpu.memory_space<vmem>>, vector<1x1x1x1xf32>
    %105 = vector.shape_cast %104 : vector<1x1x1x1xf32> to vector<1x1xf32>
    %106 = vector.shape_cast %103 : vector<1x1xf32> to vector<1x1x1x1xf32>
    tpu.vector_store %arg9[%c0_56, %c0_57, %c0_58, %c0_59], %106 {strides = array<i32>} : memref<1x1x1x1xf32, #tpu.memory_space<vmem>>, vector<1x1x1x1xf32>,
    return
  }
  func.func @transform_0(%arg0: i32, %arg1: i32) -> (i32, i32, i32, i32) {
    %c0_i32 = arith.constant 0 : i32
    %c0_i32_0 = arith.constant 0 : i32
    %c0_i32_1 = arith.constant 0 : i32
    %c0_i32_2 = arith.constant 0 : i32
    return %arg0, %c0_i32, %c0_i32_0, %c0_i32_1 : i32, i32, i32, i32
  }
  func.func @transform_1(%arg0: i32, %arg1: i32) -> (i32, i32) {
    %c0_i32 = arith.constant 0 : i32
    %c0_i32_0 = arith.constant 0 : i32
    return %arg1, %c0_i32 : i32, i32
  }
  func.func @transform_2(%arg0: i32, %arg1: i32) -> (i32, i32) {
    %c0_i32 = arith.constant 0 : i32
    %c0_i32_0 = arith.constant 0 : i32
    %c0_i32_1 = arith.constant 0 : i32
    return %c0_i32, %c0_i32_0 : i32, i32
  }
  func.func @transform_3(%arg0: i32, %arg1: i32) -> i32 {
    %c0_i32 = arith.constant 0 : i32
    %c0_i32_0 = arith.constant 0 : i32
    return %c0_i32 : i32
  }
  func.func @transform_4(%arg0: i32, %arg1: i32) -> i32 {
    %c0_i32 = arith.constant 0 : i32
    %c0_i32_0 = arith.constant 0 : i32
    return %c0_i32 : i32
  }
  func.func @transform_5(%arg0: i32, %arg1: i32) -> (i32, i32, i32) {
    %c0_i32 = arith.constant 0 : i32
    %c0_i32_0 = arith.constant 0 : i32
    return %arg0, %arg1, %c0_i32 : i32, i32, i32
  }
  func.func @transform_6(%arg0: i32, %arg1: i32) -> (i32, i32, i32) {
    %c0_i32 = arith.constant 0 : i32
    %c0_i32_0 = arith.constant 0 : i32
    return %arg0, %arg1, %c0_i32 : i32, i32, i32
  }
  func.func @transform_7(%arg0: i32, %arg1: i32) -> (i32, i32, i32, i32) {
    %c0_i32 = arith.constant 0 : i32
    %c0_i32_0 = arith.constant 0 : i32
    %c0_i32_1 = arith.constant 0 : i32
    return %arg0, %arg1, %c0_i32, %c0_i32_0 : i32, i32, i32, i32
  }
}

</mosaic_0001>

<llo_original>
// kernel: tpu_custom_call.1
$region0: #{tpu_custom_call.1}
  #allocation0 [shape = 'u32[]', space=smem, size = 0x4, offset = 0x4, fixed_abs, tag = 'smem constant byte address 0x4 - core index']
  #allocation1 [shape = 'u32[144,128]{1,0:T(1,128)}', space=vmem, size = 0x12000, scoped, tag = 'internal scratch']
  #allocation2 [shape = 'f32[1]{0:T(128)S(6)}', space=smem, size = 0x200, scoped, tag = 'scoped memory for tpu_custom_call.1']
  %s0 = inlined_call_operand.hbm [shape: bf16[2,9,8,32], index: 0, kind: input, shape index: {}]
  %s1 = inlined_call_operand.hbm [shape: bf16[16,8], index: 1, kind: input, shape index: {}]
  %s2 = inlined_call_operand.hbm [shape: bf16[32,128], index: 2, kind: input, shape index: {}]
  %s3 = inlined_call_operand.hbm [shape: f32[9], index: 3, kind: input, shape index: {}]
  %s4 = inlined_call_operand.<no memory space> [shape: f32[1], index: 4, kind: input, shape index: {}]
  %s5 = inlined_call_operand.hbm [shape: f32[2,16,128], index: 5, kind: input, shape index: {}]
  %s6 = inlined_call_operand.hbm [shape: f32[2,16,128], index: 6, kind: output, shape index: {0}]
  %s7 = inlined_call_operand.hbm [shape: f32[2,1,1,1], index: 7, kind: output, shape index: {1}]
  %8 = xla_tuple %s6, %s7
  %s9 = sld [smem:[#allocation0]]
  $region85: #{tpu_custom_call.1} parent=0
    _
  %s11 = ssub.s32 1, %s9
  %s12 = scalar_select 0, %s11, %s9
  %13 = sst [smem:[#allocation2]] %s4
  $region1: #{tpu_custom_call.1} parent=0
    #allocation3 [shape = 'u8[36864]{0}', space=vmem, size = 0x9000, scoped, tag = 'input window, operand 0']
    #allocation4 [shape = 's32[2]{0}', space=sflag, size = 0x8, scoped, tag = 'scoped memory for tpu_custom_call.1']
    #allocation5 [shape = 's32[2]{0}', space=sflag, size = 0x8, scoped, tag = 'scoped memory for tpu_custom_call.1']
    #allocation6 [shape = 's32[2]{0}', space=sflag, size = 0x8, scoped, tag = 'scoped memory for tpu_custom_call.1']
    #allocation7 [shape = 'u8[4096]{0}', space=vmem, size = 0x1000, scoped, tag = 'input window, operand 1, single buffered']
    #allocation8 [shape = 's32[1]{0}', space=sflag, size = 0x4, scoped, tag = 'scoped memory for tpu_custom_call.1']
    #allocation9 [shape = 'u8[8192]{0}', space=vmem, size = 0x2000, scoped, tag = 'input window, operand 2, single buffered']
    #allocation10 [shape = 'u8[512]{0}', space=smem, size = 0x200, scoped, tag = 'input window, operand 3, single buffered']
    #allocation11 [shape = 'u8[16384]{0}', space=vmem, size = 0x4000, scoped, tag = 'input window, operand 5']
    #allocation12 [shape = 's32[2]{0}', space=sflag, size = 0x8, scoped, tag = 'scoped memory for tpu_custom_call.1']
    #allocation13 [shape = 'u8[16384]{0}', space=vmem, size = 0x4000, scoped, tag = 'output window, operand 0']
    #allocation14 [shape = 'u8[1024]{0}', space=vmem, size = 0x400, scoped, tag = 'output window, operand 1']
    #allocation15 [shape = 's32[2]{0}', space=sflag, size = 0x8, scoped, tag = 'scoped memory for tpu_custom_call.1']
    %14 = vsyncpa [#allocation4], 0
    %s15 = scalar_lea.sflag [#allocation4], 1
    %16 = vsyncpa %s15, 0
    %17 = vsyncpa [#allocation8], 0
    %18 = vsyncpa [#allocation6], 0
    %19 = vsyncpa [#allocation12], 0
    %s20 = scalar_lea.sflag [#allocation12], 1
    %21 = vsyncpa %s20, 0
    %22 = vsyncpa [#allocation5], 0
    %s23 = scalar_lea.sflag [#allocation5], 1
    %24 = vsyncpa %s23, 0
    %25 = vsyncpa [#allocation15], 0
    %s26 = scalar_lea.sflag [#allocation15], 1
    %27 = vsyncpa %s26, 0
    loop: start=0, step=1, limit=4
    $region2: #{tpu_custom_call.1} parent=1 // loop_pre_header
      _
    $region3: #{tpu_custom_call.1} parent=1 // loop_header
      %s29 = sphi 0, %s33
      %p30 = scmp.ge.s32.totalorder %s29, 4
      %s36 = sphi 0, %s48
      %s37 = sphi 0, %s44
      %s38 = sphi 0, %s36
      %s39 = sphi 0, %s37
      %s40 = sphi 0, %s38
      %s41 = sphi 0, %s39
      %s51 = sphi 0, %s53
      %s54 = sphi 0, %s51
      %s55 = sphi 0, %s54
      %s71 = sphi 0, %s55
      %s77 = sphi 0, %s79
      %s80 = sphi 0, %s77
      %s81 = sphi 0, %s80
      %s97 = sphi 0, %s81
      %s101 = sphi 0, %s101
      %s103 = sphi 0, %s101
      %s104 = sphi 0, %s103
      %s118 = sphi 0, %s104
      %s122 = sphi 0, %s122
      %s124 = sphi 0, %s122
      %s125 = sphi 0, %s124
      %s139 = sphi 0, %s125
      %s143 = sphi 0, %s143
      %s145 = sphi 0, %s143
      %s146 = sphi 0, %s145
      %s160 = sphi 0, %s146
      %s168 = sphi 0, %s170
      %s171 = sphi 0, %s168
      %s172 = sphi 0, %s171
      %s188 = sphi 0, %s172
      %s196 = sphi 0, %s198
      %s199 = sphi 0, %s196
      %s200 = sphi 0, %s199
      %s216 = sphi 0, %s200
      %s224 = sphi 0, %s226
      %s227 = sphi 0, %s224
      %s228 = sphi 0, %s227
      %s244 = sphi 0, %s228
    $region4: #{tpu_custom_call.1} parent=1 // loop_header_branch
      %32 = sbr.rel (%p30) target = $region8
    $region5: #{tpu_custom_call.1} parent=1 // loop_body
      %s34 = ssub.s32 %s29, 1
      %s35 = ssub.s32 %s29, 2
      %s42 = sadd.s32 1, %s37
      %p43 = scmp.ge.s32.totalorder %s42, 1
      %s44 = scalar_select %p43, 0, %s42
      %s45 = sadd.s32 1, %s36
      %s46 = scalar_select %p43, %s45, %s36
      %p47 = scmp.ge.s32.totalorder %s46, 2
      %s48 = scalar_select %p47, 0, %s46
      %s49 = ssub.s32 %s36, %s48
      %p50 = scmp.eq.s32.totalorder %s49, 0
      %s52 = sadd.s32 %s51, 1
      %s53 = scalar_select %p50, %s51, %s52
      %p56 = pneg %p50
      %p57 = scmp.eq.s32.totalorder %s29, 1
      %p58 = por %p56, %p57
      %p59 = scmp.ne.s32.totalorder %s51, %s54
      %p60 = scmp.eq.s32.totalorder %s29, 0
      %p61 = por %p59, %p60
      %p62 = scmp.ne.s32.totalorder %s51, %s54
      %p63 = scmp.eq.s32.totalorder %s34, 1
      %p64 = por %p62, %p63
      %p65 = scmp.ne.s32.totalorder %s54, %s55
      %p66 = scmp.eq.s32.totalorder %s34, 0
      %p67 = por %p65, %p66
      %p68 = scmp.ne.s32.totalorder %s54, %s55
      %p69 = scmp.eq.s32.totalorder %s35, 1
      %p70 = por %p68, %p69
      %p72 = scmp.ne.s32.totalorder %s55, %s71
      %p73 = scmp.eq.s32.totalorder %s35, 0
      %p74 = por %p72, %p73
      %s75 = ssub.s32 %s37, %s44
      %p76 = scmp.eq.s32.totalorder %s75, 0
      %s78 = sadd.s32 %s77, 1
      %s79 = scalar_select %p76, %s77, %s78
      %p82 = pneg %p76
      %p83 = scmp.eq.s32.totalorder %s29, 1
      %p84 = por %p82, %p83
      %p85 = scmp.ne.s32.totalorder %s77, %s80
      %p86 = scmp.eq.s32.totalorder %s29, 0
      %p87 = por %p85, %p86
      %p88 = scmp.ne.s32.totalorder %s77, %s80
      %p89 = scmp.eq.s32.totalorder %s34, 1
      %p90 = por %p88, %p89
      %p91 = scmp.ne.s32.totalorder %s80, %s81
      %p92 = scmp.eq.s32.totalorder %s34, 0
      %p93 = por %p91, %p92
      %p94 = scmp.ne.s32.totalorder %s80, %s81
      %p95 = scmp.eq.s32.totalorder %s35, 1
      %p96 = por %p94, %p95
      %p98 = scmp.ne.s32.totalorder %s81, %s97
      %p99 = scmp.eq.s32.totalorder %s35, 0
      %p100 = por %p98, %p99
      %s102 = sadd.s32 %s101, 1
      %p105 = scmp.eq.s32.totalorder %s29, 1
      %p106 = scmp.ne.s32.totalorder %s101, %s103
      %p107 = scmp.eq.s32.totalorder %s29, 0
      %p108 = por %p106, %p107
      %p109 = scmp.ne.s32.totalorder %s101, %s103
      %p110 = scmp.eq.s32.totalorder %s34, 1
      %p111 = por %p109, %p110
      %p112 = scmp.ne.s32.totalorder %s103, %s104
      %p113 = scmp.eq.s32.totalorder %s34, 0
      %p114 = por %p112, %p113
      %p115 = scmp.ne.s32.totalorder %s103, %s104
      %p116 = scmp.eq.s32.totalorder %s35, 1
      %p117 = por %p115, %p116
      %p119 = scmp.ne.s32.totalorder %s104, %s118
      %p120 = scmp.eq.s32.totalorder %s35, 0
      %p121 = por %p119, %p120
      %s123 = sadd.s32 %s122, 1
      %p126 = scmp.eq.s32.totalorder %s29, 1
      %p127 = scmp.ne.s32.totalorder %s122, %s124
      %p128 = scmp.eq.s32.totalorder %s29, 0
      %p129 = por %p127, %p128
      %p130 = scmp.ne.s32.totalorder %s122, %s124
      %p131 = scmp.eq.s32.totalorder %s34, 1
      %p132 = por %p130, %p131
      %p133 = scmp.ne.s32.totalorder %s124, %s125
      %p134 = scmp.eq.s32.totalorder %s34, 0
      %p135 = por %p133, %p134
      %p136 = scmp.ne.s32.totalorder %s124, %s125
      %p137 = scmp.eq.s32.totalorder %s35, 1
      %p138 = por %p136, %p137
      %p140 = scmp.ne.s32.totalorder %s125, %s139
      %p141 = scmp.eq.s32.totalorder %s35, 0
      %p142 = por %p140, %p141
      %s144 = sadd.s32 %s143, 1
      %p147 = scmp.eq.s32.totalorder %s29, 1
      %p148 = scmp.ne.s32.totalorder %s143, %s145
      %p149 = scmp.eq.s32.totalorder %s29, 0
      %p150 = por %p148, %p149
      %p151 = scmp.ne.s32.totalorder %s143, %s145
      %p152 = scmp.eq.s32.totalorder %s34, 1
      %p153 = por %p151, %p152
      %p154 = scmp.ne.s32.totalorder %s145, %s146
      %p155 = scmp.eq.s32.totalorder %s34, 0
      %p156 = por %p154, %p155
      %p157 = scmp.ne.s32.totalorder %s145, %s146
      %p158 = scmp.eq.s32.totalorder %s35, 1
      %p159 = por %p157, %p158
      %p161 = scmp.ne.s32.totalorder %s146, %s160
      %p162 = scmp.eq.s32.totalorder %s35, 0
      %p163 = por %p161, %p162
      %s164 = ssub.s32 %s36, %s48
      %s165 = ssub.s32 %s37, %s44
      %s166 = sor.u32 %s164, %s165
      %p167 = scmp.eq.s32.totalorder %s166, 0
      %s169 = sadd.s32 %s168, 1
      %s170 = scalar_select %p167, %s168, %s169
      %p173 = pneg %p167
      %p174 = scmp.eq.s32.totalorder %s29, 1
      %p175 = por %p173, %p174
      %p176 = scmp.ne.s32.totalorder %s168, %s171
      %p177 = scmp.eq.s32.totalorder %s29, 0
      %p178 = por %p176, %p177
      %p179 = scmp.ne.s32.totalorder %s168, %s171
      %p180 = scmp.eq.s32.totalorder %s34, 1
      %p181 = por %p179, %p180
      %p182 = scmp.ne.s32.totalorder %s171, %s172
      %p183 = scmp.eq.s32.totalorder %s34, 0
      %p184 = por %p182, %p183
      %p185 = scmp.ne.s32.totalorder %s171, %s172
      %p186 = scmp.eq.s32.totalorder %s35, 1
      %p187 = por %p185, %p186
      %p189 = scmp.ne.s32.totalorder %s172, %s188
      %p190 = scmp.eq.s32.totalorder %s35, 0
      %p191 = por %p189, %p190
      %s192 = ssub.s32 %s36, %s48
      %s193 = ssub.s32 %s37, %s44
      %s194 = sor.u32 %s192, %s193
      %p195 = scmp.eq.s32.totalorder %s194, 0
      %s197 = sadd.s32 %s196, 1
      %s198 = scalar_select %p195, %s196, %s197
      %p201 = pneg %p195
      %p202 = scmp.eq.s32.totalorder %s29, 1
      %p203 = por %p201, %p202
      %p204 = scmp.ne.s32.totalorder %s196, %s199
      %p205 = scmp.eq.s32.totalorder %s29, 0
      %p206 = por %p204, %p205
      %p207 = scmp.ne.s32.totalorder %s196, %s199
      %p208 = scmp.eq.s32.totalorder %s34, 1
      %p209 = por %p207, %p208
      %p210 = scmp.ne.s32.totalorder %s199, %s200
      %p211 = scmp.eq.s32.totalorder %s34, 0
      %p212 = por %p210, %p211
      %p213 = scmp.ne.s32.totalorder %s199, %s200
      %p214 = scmp.eq.s32.totalorder %s35, 1
      %p215 = por %p213, %p214
      %p217 = scmp.ne.s32.totalorder %s200, %s216
      %p218 = scmp.eq.s32.totalorder %s35, 0
      %p219 = por %p217, %p218
      %s220 = ssub.s32 %s36, %s48
      %s221 = ssub.s32 %s37, %s44
      %s222 = sor.u32 %s220, %s221
      %p223 = scmp.eq.s32.totalorder %s222, 0
      %s225 = sadd.s32 %s224, 1
      %s226 = scalar_select %p223, %s224, %s225
      %p229 = pneg %p223
      %p230 = scmp.eq.s32.totalorder %s29, 1
      %p231 = por %p229, %p230
      %p232 = scmp.ne.s32.totalorder %s224, %s227
      %p233 = scmp.eq.s32.totalorder %s29, 0
      %p234 = por %p232, %p233
      %p235 = scmp.ne.s32.totalorder %s224, %s227
      %p236 = scmp.eq.s32.totalorder %s34, 1
      %p237 = por %p235, %p236
      %p238 = scmp.ne.s32.totalorder %s227, %s228
      %p239 = scmp.eq.s32.totalorder %s34, 0
      %p240 = por %p238, %p239
      %p241 = scmp.ne.s32.totalorder %s227, %s228
      %p242 = scmp.eq.s32.totalorder %s35, 1
      %p243 = por %p241, %p242
      %p245 = scmp.ne.s32.totalorder %s228, %s244
      %p246 = scmp.eq.s32.totalorder %s35, 0
      %p247 = por %p245, %p246
      %p248 = scmp.le.s32.totalorder 1, %s29
      %p249 = scmp.lt.s32.totalorder %s29, 3
      %p250 = pnand %p248, %p249
      %p251 = pneg %p250
      // Predicated region
      $region9: #{tpu_custom_call.1} parent=5 // pred_check
        _
      $region10: #{tpu_custom_call.1} parent=5 // pred_check_branch
        %253 = sbr.rel (%p250) target = $region12
      $region11: #{tpu_custom_call.1} parent=5 // pred_region
        %s254 = ssub.s32 %s29, 1
        // Predicated region
        $region13: #{tpu_custom_call.1} parent=11 // pred_check
          %p255 = pneg %p93
        $region14: #{tpu_custom_call.1} parent=11 // pred_check_branch
          %257 = sbr.rel (%p255) target = $region16
        $region15: #{tpu_custom_call.1} parent=11 // pred_region
          %s258 = smul.u32 2, %s39
          %s260 = ssub.s32 128, 128
          %261 = vsyncadd [#allocation8], %s260
          %s262 = smul.addr %s258, 64
          %s263 = scalar_lea.hbm %s1, %s262
          %s264 = sshll.u32 [#allocation7], 4
          %s265 = int_to_ptr.vmem [resolvable:$true] %s264
          %270 = dma.hbm_to_vmem [thread:$0]  %s263, 128, %s265, [#allocation8], 64, 64, 4
        $region16: #{tpu_custom_call.1} parent=11 // pred_fallthru
          _
        // Predicated region
        $region17: #{tpu_custom_call.1} parent=11 // pred_check
          %p271 = pneg %p114
        $region18: #{tpu_custom_call.1} parent=11 // pred_check_branch
          %273 = sbr.rel (%p271) target = $region20
        $region19: #{tpu_custom_call.1} parent=11 // pred_region
          %s275 = ssub.s32 256, 256
          %276 = vsyncadd [#allocation8], %s275
          %s277 = sshll.u32 [#allocation9], 4
          %s278 = int_to_ptr.vmem [resolvable:$true] %s277
          %283 = dma.hbm_to_vmem [thread:$0]  %s2, 256, %s278, [#allocation8], 64, 64, 4
        $region20: #{tpu_custom_call.1} parent=11 // pred_fallthru
          _
        // Predicated region
        $region21: #{tpu_custom_call.1} parent=11 // pred_check
          %p284 = pneg %p135
        $region22: #{tpu_custom_call.1} parent=11 // pred_check_branch
          %286 = sbr.rel (%p284) target = $region24
        $region23: #{tpu_custom_call.1} parent=11 // pred_region
          %s288 = ssub.s32 16, 16
          %289 = vsyncadd [#allocation6], %s288
          %292 = dma.hbm_to_smem %s3, 16, [#allocation10], [#allocation6]
        $region24: #{tpu_custom_call.1} parent=11 // pred_fallthru
          _
        // Predicated region
        $region25: #{tpu_custom_call.1} parent=11 // pred_check
          %p293 = pneg %p156
        $region26: #{tpu_custom_call.1} parent=11 // pred_check_branch
          %295 = sbr.rel (%p293) target = $region28
        $region27: #{tpu_custom_call.1} parent=11 // pred_region
          _
        $region28: #{tpu_custom_call.1} parent=11 // pred_fallthru
          _
      $region12: #{tpu_custom_call.1} parent=5 // pred_fallthru
        _
      %p296 = scmp.lt.s32.totalorder %s29, 2
      // Predicated region
      $region29: #{tpu_custom_call.1} parent=5 // pred_check
        %p297 = pneg %p296
      $region30: #{tpu_custom_call.1} parent=5 // pred_check_branch
        %299 = sbr.rel (%p297) target = $region32
      $region31: #{tpu_custom_call.1} parent=5 // pred_region
        // Predicated region
        $region33: #{tpu_custom_call.1} parent=31 // pred_check
          %p300 = pneg %p61
        $region34: #{tpu_custom_call.1} parent=31 // pred_check_branch
          %302 = sbr.rel (%p300) target = $region36
        $region35: #{tpu_custom_call.1} parent=31 // pred_region
          %s303 = sand.u32 %s51, 1
          %s304 = scalar_lea.sflag [#allocation4], %s303
          %s305 = sand.u32 %s51, 1
          %s306 = smul.addr %s305, 36
          %s307 = scalar_lea.vmem [#allocation3], %s306
          %s309 = ssub.s32 576, 576
          %310 = vsyncadd %s304, %s309
          %s311 = smul.addr %s36, 9
          %s312 = smul.addr %s311, 64
          %s313 = scalar_lea.hbm %s0, %s312
          %s314 = sshll.u32 %s307, 4
          %s315 = int_to_ptr.vmem [resolvable:$true] %s314
          %320 = dma.hbm_to_vmem [thread:$0]  %s313, 576, %s315, %s304, 64, 64, 4
        $region36: #{tpu_custom_call.1} parent=31 // pred_fallthru
          _
        // Predicated region
        $region37: #{tpu_custom_call.1} parent=31 // pred_check
          %p321 = pneg %p178
        $region38: #{tpu_custom_call.1} parent=31 // pred_check_branch
          %323 = sbr.rel (%p321) target = $region40
        $region39: #{tpu_custom_call.1} parent=31 // pred_region
          %s324 = sand.u32 %s168, 1
          %s325 = scalar_lea.sflag [#allocation12], %s324
          %s326 = sand.u32 %s168, 1
          %s327 = smul.addr %s326, 16
          %s328 = scalar_lea.vmem [#allocation11], %s327
          %s329 = smul.u32 2, %s37
          %s331 = ssub.s32 256, 256
          %332 = vsyncadd %s325, %s331
          %s333 = smul.addr %s36, 2
          %s334 = sadd.s32 %s329, %s333
          %s335 = smul.addr %s334, 128
          %s336 = scalar_lea.hbm %s5, %s335
          %s337 = sshll.u32 %s328, 4
          %s338 = int_to_ptr.vmem [resolvable:$true] %s337
          %343 = dma.hbm_to_vmem [thread:$0]  %s336, 256, %s338, %s325, 128, 128, 8
        $region40: #{tpu_custom_call.1} parent=31 // pred_fallthru
          _
      $region32: #{tpu_custom_call.1} parent=5 // pred_fallthru
        _
      %p344 = scmp.le.s32.totalorder 1, %s29
      %p345 = scmp.lt.s32.totalorder %s29, 3
      %p346 = pnand %p344, %p345
      %p347 = pneg %p346
      // Predicated region
      $region41: #{tpu_custom_call.1} parent=5 // pred_check
        _
      $region42: #{tpu_custom_call.1} parent=5 // pred_check_branch
        %349 = sbr.rel (%p346) target = $region44
      $region43: #{tpu_custom_call.1} parent=5 // pred_region
        %s350 = ssub.s32 %s29, 1
        %s351 = sand.u32 %s54, 1
        %s352 = scalar_lea.sflag [#allocation4], %s351
        %s353 = sand.u32 %s54, 1
        %s354 = smul.addr %s353, 36
        %s355 = scalar_lea.vmem [#allocation3], %s354
        // Predicated region
        $region45: #{tpu_custom_call.1} parent=43 // pred_check
          %p356 = pneg %p67
        $region46: #{tpu_custom_call.1} parent=43 // pred_check_branch
          %358 = sbr.rel (%p356) target = $region48
        $region47: #{tpu_custom_call.1} parent=43 // pred_region
          %359 = dma.done %s352, 576
        $region48: #{tpu_custom_call.1} parent=43 // pred_fallthru
          _
        // Predicated region
        $region49: #{tpu_custom_call.1} parent=43 // pred_check
          %p360 = pneg %p93
        $region50: #{tpu_custom_call.1} parent=43 // pred_check_branch
          %362 = sbr.rel (%p360) target = $region52
        $region51: #{tpu_custom_call.1} parent=43 // pred_region
          %363 = dma.done [#allocation8], 128
        $region52: #{tpu_custom_call.1} parent=43 // pred_fallthru
          _
        // Predicated region
        $region53: #{tpu_custom_call.1} parent=43 // pred_check
          %p364 = pneg %p114
        $region54: #{tpu_custom_call.1} parent=43 // pred_check_branch
          %366 = sbr.rel (%p364) target = $region56
        $region55: #{tpu_custom_call.1} parent=43 // pred_region
          %367 = dma.done [#allocation8], 256
        $region56: #{tpu_custom_call.1} parent=43 // pred_fallthru
          _
        // Predicated region
        $region57: #{tpu_custom_call.1} parent=43 // pred_check
          %p368 = pneg %p135
        $region58: #{tpu_custom_call.1} parent=43 // pred_check_branch
          %370 = sbr.rel (%p368) target = $region60
        $region59: #{tpu_custom_call.1} parent=43 // pred_region
          %371 = dma.done [#allocation6], 16
        $region60: #{tpu_custom_call.1} parent=43 // pred_fallthru
          _
        %s372 = sand.u32 %s171, 1
        %s373 = scalar_lea.sflag [#allocation12], %s372
        %s374 = sand.u32 %s171, 1
        %s375 = smul.addr %s374, 16
        %s376 = scalar_lea.vmem [#allocation11], %s375
        // Predicated region
        $region61: #{tpu_custom_call.1} parent=43 // pred_check
          %p377 = pneg %p184
        $region62: #{tpu_custom_call.1} parent=43 // pred_check_branch
          %379 = sbr.rel (%p377) target = $region64
        $region63: #{tpu_custom_call.1} parent=43 // pred_region
          %380 = dma.done %s373, 256
        $region64: #{tpu_custom_call.1} parent=43 // pred_fallthru
          _
        %381 = sfence
        %s382 = sand.u32 %s54, 1
        %s383 = scalar_lea.sflag [#allocation4], %s382
        %s384 = sand.u32 %s54, 1
        %s385 = smul.addr %s384, 36
        %s386 = scalar_lea.vmem [#allocation3], %s385
        %p387 = pneg %p67
        %p388 = pneg %p64
        %p389 = pneg %p93
        %p390 = pneg %p90
        %p391 = pneg %p114
        %p392 = pneg %p111
        %p393 = pneg %p135
        %p394 = pneg %p132
        %p395 = pneg %p156
        %p396 = pneg %p153
        %s397 = sand.u32 %s171, 1
        %s398 = scalar_lea.sflag [#allocation12], %s397
        %s399 = sand.u32 %s171, 1
        %s400 = smul.addr %s399, 16
        %s401 = scalar_lea.vmem [#allocation11], %s400
        %p402 = pneg %p184
        %p403 = pneg %p181
        %p404 = pneg %p212
        %p405 = pneg %p209
        %s406 = sand.u32 %s199, 1
        %s407 = scalar_lea.sflag [#allocation5], %s406
        %s408 = sand.u32 %s199, 1
        %s409 = smul.addr %s408, 16
        %s410 = scalar_lea.vmem [#allocation13], %s409
        %p411 = pneg %p240
        %p412 = pneg %p237
        %s413 = sand.u32 %s227, 1
        %s414 = scalar_lea.sflag [#allocation15], %s413
        %s415 = sand.u32 %s227, 1
        %s416 = scalar_lea.vmem [#allocation14], %s415
        %s417 = smul.u32 2, %s39
        %s418 = smul.u32 2, %s39
        %s419 = smul.u32 2, %s39
        %s421 = sld [smem:[#allocation10]]
        %v422 = vld [vmem:[%s355] sm:$0xf]
        %v423 = vunpack.c.l.bf16 %v422
        %v424 = vstv %s421
        %v425 = vmul.f32 %v424, %v423
        %s426 = sld [smem:[#allocation10 + $0x1]]
        %s427 = scalar_lea.vmem %s355, 4 [#allocation3]
        %v428 = vld [vmem:[%s427] sm:$0xf]
        %v429 = vunpack.c.l.bf16 %v428
        %v430 = vstv %s426
        %v431 = vmul.f32 %v430, %v429
        %v432 = vadd.f32 %v425, %v431
        %s433 = sld [smem:[#allocation10 + $0x2]]
        %s434 = scalar_lea.vmem %s355, 8 [#allocation3]
        %v435 = vld [vmem:[%s434] sm:$0xf]
        %v436 = vunpack.c.l.bf16 %v435
        %v437 = vstv %s433
        %v438 = vmul.f32 %v437, %v436
        %v439 = vadd.f32 %v432, %v438
        %s440 = sld [smem:[#allocation10 + $0x3]]
        %s441 = scalar_lea.vmem %s355, 12 [#allocation3]
        %v442 = vld [vmem:[%s441] sm:$0xf]
        %v443 = vunpack.c.l.bf16 %v442
        %v444 = vstv %s440
        %v445 = vmul.f32 %v444, %v443
        %v446 = vadd.f32 %v439, %v445
        %s447 = sld [smem:[#allocation10 + $0x4]]
        %s448 = scalar_lea.vmem %s355, 16 [#allocation3]
        %v449 = vld [vmem:[%s448] sm:$0xf]
        %v450 = vunpack.c.l.bf16 %v449
        %v451 = vstv %s447
        %v452 = vmul.f32 %v451, %v450
        %v453 = vadd.f32 %v446, %v452
        %s454 = sld [smem:[#allocation10 + $0x5]]
        %s455 = scalar_lea.vmem %s355, 20 [#allocation3]
        %v456 = vld [vmem:[%s455] sm:$0xf]
        %v457 = vunpack.c.l.bf16 %v456
        %v458 = vstv %s454
        %v459 = vmul.f32 %v458, %v457
        %v460 = vadd.f32 %v453, %v459
        %s461 = sld [smem:[#allocation10 + $0x6]]
        %s462 = scalar_lea.vmem %s355, 24 [#allocation3]
        %v463 = vld [vmem:[%s462] sm:$0xf]
        %v464 = vunpack.c.l.bf16 %v463
        %v465 = vstv %s461
        %v466 = vmul.f32 %v465, %v464
        %v467 = vadd.f32 %v460, %v466
        %s468 = sld [smem:[#allocation10 + $0x7]]
        %s469 = scalar_lea.vmem %s355, 28 [#allocation3]
        %v470 = vld [vmem:[%s469] sm:$0xf]
        %v471 = vunpack.c.l.bf16 %v470
        %v472 = vstv %s468
        %v473 = vmul.f32 %v472, %v471
        %v474 = vadd.f32 %v467, %v473
        %s475 = sld [smem:[#allocation10 + $0x8]]
        %s476 = scalar_lea.vmem %s355, 32 [#allocation3]
        %v477 = vld [vmem:[%s476] sm:$0xf]
        %v478 = vunpack.c.l.bf16 %v477
        %v479 = vstv %s475
        %v480 = vmul.f32 %v479, %v478
        %v481 = vadd.f32 %v474, %v480
        %v482 = vpack.c.bf16 %v481, %v481
        %v483 = vld [vmem:[#allocation7] sm:$0xf]
        %v484 = vld [vmem:[#allocation7 + $0x4] sm:$0xf]
        %v487 = vunpack.c.l.b16 %v483
        %v488 = vunpack.c.l.b16 %v484
        %v489 = vpack.c.b16 %v488, %v487
        %vm490 = vcmask 64512
        %v492 = vsel %vm490, %v489, 0
        %vm494 = vcmask 1043456
        %v496 = vsel %vm494, %v482, 0
        %498 = vmatprep.subr.bf16.mxu0 0
        %499 = vmatpush1.bf16.msra.mxu0 %v496
        %500 = vmatprep.subr.bf16.mxu0 0
        %501 = vmatpush1.bf16.msra.mxu0 0
        %502 = vmatprep.subr.bf16.mxu0 0
        %503 = vmatpush1.bf16.msra.mxu0 0
        %504 = vmatprep.subr.bf16.mxu0 0
        %505 = vmatpush1.bf16.msra.mxu0 0
        %506 = vmatprep.subr.bf16.mxu0 0
        %507 = vmatpush1.bf16.msra.mxu0 0
        %508 = vmatprep.subr.bf16.mxu0 0
        %509 = vmatpush1.bf16.msra.mxu0 0
        %510 = vmatprep.subr.bf16.mxu0 0
        %511 = vmatpush1.bf16.msra.mxu0 0
        %512 = vmatprep.subr.bf16.mxu0 0
        %513 = vmatpush1.bf16.msra.mxu0 0
        %514 = vmatprep.subr.bf16.mxu0 0
        %515 = vmatpush1.bf16.msra.mxu0 0
        %516 = vmatprep.subr.bf16.mxu0 0
        %517 = vmatpush1.bf16.msra.mxu0 0
        %518 = vmatprep.subr.bf16.mxu0 0
        %519 = vmatpush1.bf16.msra.mxu0 0
        %520 = vmatprep.subr.bf16.mxu0 0
        %521 = vmatpush1.bf16.msra.mxu0 0
        %522 = vmatprep.subr.bf16.mxu0 0
        %523 = vmatpush1.bf16.msra.mxu0 0
        %524 = vmatprep.subr.bf16.mxu0 0
        %525 = vmatpush1.bf16.msra.mxu0 0
        %526 = vmatprep.subr.bf16.mxu0 0
        %527 = vmatpush1.bf16.msra.mxu0 0
        %528 = vmatprep.subr.bf16.mxu0 0
        %529 = vmatpush1.bf16.msra.mxu0 0
        %530 = vmatprep.mubr.bf16.mxu0 0
        %531 = vmatmul.mubr.bf16.gmra.mrb[0].mxu0 %v492
        %v532 = vpop.f32.mrb[0].mxu0
        %v533 = vadd.f32 0.0, %v532
        %v534 = vpop.f32.mrb[0].mxu0
        %v535 = vpop.f32.mrb[0].mxu0
        %v536 = vadd.f32 0.0, %v535
        %v537 = vpop.f32.mrb[0].mxu0
        %538 = vdwg.mxu0
        %v539 = vpack.c.bf16 %v536, %v533
        %v540 = vld [vmem:[#allocation9] sm:$0xf]
        %v541 = vld [vmem:[#allocation9 + $0x4] sm:$0xf]
        %v542 = vld [vmem:[#allocation9 + $0x8] sm:$0xf]
        %v543 = vld [vmem:[#allocation9 + $0xc] sm:$0xf]
        %s544 = sld [smem:[#allocation2]]
        %v545 = vstv %s544
        %v550 = vunpack.c.l.b16 %v540
        %v551 = vunpack.c.l.b16 %v541
        %v552 = vunpack.c.l.b16 %v542
        %v553 = vunpack.c.l.b16 %v543
        %v554 = vpack.c.b16 %v551, %v550
        %v555 = vpack.c.b16 %v553, %v552
        %vm558 = vcmask 261120
        %v560 = vsel %vm558, %v539, 0
        %562 = vmatprep.subr.bf16.mxu0 0
        %563 = vmatpush1.bf16.msra.mxu0 %v554
        %564 = vmatprep.subr.bf16.mxu0 0
        %565 = vmatpush1.bf16.msra.mxu0 %v555
        %566 = vmatprep.subr.bf16.mxu0 0
        %567 = vmatpush1.bf16.msra.mxu0 0
        %568 = vmatprep.subr.bf16.mxu0 0
        %569 = vmatpush1.bf16.msra.mxu0 0
        %570 = vmatprep.subr.bf16.mxu0 0
        %571 = vmatpush1.bf16.msra.mxu0 0
        %572 = vmatprep.subr.bf16.mxu0 0
        %573 = vmatpush1.bf16.msra.mxu0 0
        %574 = vmatprep.subr.bf16.mxu0 0
        %575 = vmatpush1.bf16.msra.mxu0 0
        %576 = vmatprep.subr.bf16.mxu0 0
        %577 = vmatpush1.bf16.msra.mxu0 0
        %578 = vmatprep.subr.bf16.mxu0 0
        %579 = vmatpush1.bf16.msra.mxu0 0
        %580 = vmatprep.subr.bf16.mxu0 0
        %581 = vmatpush1.bf16.msra.mxu0 0
        %582 = vmatprep.subr.bf16.mxu0 0
        %583 = vmatpush1.bf16.msra.mxu0 0
        %584 = vmatprep.subr.bf16.mxu0 0
        %585 = vmatpush1.bf16.msra.mxu0 0
        %586 = vmatprep.subr.bf16.mxu0 0
        %587 = vmatpush1.bf16.msra.mxu0 0
        %588 = vmatprep.subr.bf16.mxu0 0
        %589 = vmatpush1.bf16.msra.mxu0 0
        %590 = vmatprep.subr.bf16.mxu0 0
        %591 = vmatpush1.bf16.msra.mxu0 0
        %592 = vmatprep.subr.bf16.mxu0 0
        %593 = vmatpush1.bf16.msra.mxu0 0
        %594 = vmatprep.mubr.bf16.mxu0 0
        %595 = vmatmul.mubr.bf16.gmra.mrb[0].mxu0 %v560
        %v596 = vpop.f32.mrb[0].mxu0
        %v597 = vadd.f32 %v545, %v596
        %v598 = vpop.f32.mrb[0].mxu0
        %v599 = vpop.f32.mrb[0].mxu0
        %v600 = vadd.f32 %v545, %v599
        %v601 = vpop.f32.mrb[0].mxu0
        %602 = vdwg.mxu0
        %v603 = vxor.u32 %v597, 2147483648
        %v604 = vxor.u32 %v600, 2147483648
        %v605 = vmul.f32 %v603, 1.442695
        %v606 = vpow.pop %v605
        %v607 = vmul.f32 %v604, 1.442695
        %v608 = vpow.pop %v607
        %v609 = vadd.f32 %v606, 1.0
        %v610 = vadd.f32 %v608, 1.0
        %v611 = vrcp.pop %v609
        %v612 = vmul.f32 1.0, %v611
        %v613 = vrcp.pop %v610
        %v614 = vmul.f32 1.0, %v613
        %615 = vst [vmem:[%s410] sm:$0xff] %v612
        %616 = vst [vmem:[%s410 + $0x8] sm:$0xff] %v614
        %v617 = vld [vmem:[%s376] sm:$0xff]
        %v618 = vld [vmem:[%s376 + $0x8] sm:$0xff]
        %v619 = vsub.f32 0.0, %v597
        %v620 = vsub.f32 0.0, %v600
        %v621 = vmax.f32 %v619, 0.0
        %v622 = vmax.f32 %v620, 0.0
        %v623 = vand.u32 2147483647, %v597
        %v624 = vand.u32 2147483647, %v600
        %v625 = vsub.f32 0.0, %v623
        %v626 = vsub.f32 0.0, %v624
        %v627 = vmul.f32 %v625, 1.442695
        %v628 = vpow.pop %v627
        %v629 = vmul.f32 %v626, 1.442695
        %v630 = vpow.pop %v629
        %v631 = vadd.f32 %v628, 1.0
        %v632 = vadd.f32 %v630, 1.0
        %v633 = vlog2.pop %v631
        %v634 = vmul.f32 %v633, 0.6931472
        %v635 = vlog2.pop %v632
        %v636 = vmul.f32 %v635, 0.6931472
        %v637 = vadd.f32 %v621, %v634
        %v638 = vadd.f32 %v622, %v636
        %v639 = vsub.f32 1.0, %v617
        %v640 = vsub.f32 1.0, %v618
        %v641 = vmul.f32 %v639, %v597
        %v642 = vmul.f32 %v640, %v600
        %v643 = vadd.f32 %v637, %v641
        %v644 = vadd.f32 %v638, %v642
        %v645 = vmin.f32 %v643, 100.0
        %v646 = vmin.f32 %v644, 100.0
        %v647 = vadd.f32 %v645, %v646
        %648 = vadd.xlane.f32.xlu0 %v647
        %v649 = vpop.xlane.xlu0 %648
        %v650 = vrot.slane %v649, 4
        %v651 = vadd.f32 %v649, %v650
        %v652 = vrot.slane %v651, 2
        %v653 = vadd.f32 %v651, %v652
        %v654 = vrot.slane %v653, 1
        %v655 = vadd.f32 %v653, %v654
        %s656 = vtos %v655
        %v657 = vstv %s656
        %vm658 = vcmask 0
        %659 = vst.msk [vmem:[%s416] sm:$0x1] %vm658, %v657
        %s660 = sand.u32 %s199, 1
        %s661 = scalar_lea.sflag [#allocation5], %s660
        %s662 = sand.u32 %s199, 1
        %s663 = smul.addr %s662, 16
        %s664 = scalar_lea.vmem [#allocation13], %s663
        %s665 = sand.u32 %s227, 1
        %s666 = scalar_lea.sflag [#allocation15], %s665
        %s667 = sand.u32 %s227, 1
        %s668 = scalar_lea.vmem [#allocation14], %s667
        // Predicated region
        $region65: #{tpu_custom_call.1} parent=43 // pred_check
          %p669 = pneg %p209
        $region66: #{tpu_custom_call.1} parent=43 // pred_check_branch
          %671 = sbr.rel (%p669) target = $region68
        $region67: #{tpu_custom_call.1} parent=43 // pred_region
          %s672 = smul.u32 2, %s39
          %s674 = ssub.s32 256, 256
          %675 = vsyncadd %s661, %s674
          %s676 = smul.addr %s38, 2
          %s677 = sadd.s32 %s672, %s676
          %s678 = smul.addr %s677, 128
          %s679 = scalar_lea.hbm %s6, %s678
          %s680 = sshll.u32 %s664, 4
          %s681 = int_to_ptr.vmem [resolvable:$true] %s680
          %686 = dma.vmem_to_hbm [thread:$0]  %s681, 256, %s679, %s661, 128, 128, 8
        $region68: #{tpu_custom_call.1} parent=43 // pred_fallthru
          _
        // Predicated region
        $region69: #{tpu_custom_call.1} parent=43 // pred_check
          %p687 = pneg %p237
        $region70: #{tpu_custom_call.1} parent=43 // pred_check_branch
          %689 = sbr.rel (%p687) target = $region72
        $region71: #{tpu_custom_call.1} parent=43 // pred_region
          %s691 = ssub.s32 16, 16
          %692 = vsyncadd %s666, %s691
          %s693 = sadd.s32 %s39, %s38
          %s694 = smul.addr %s693, 16
          %s695 = scalar_lea.hbm %s7, %s694
          %s697 = sshll.u32 %s668, 4
          %s698 = int_to_ptr.vmem [resolvable:$true] %s697
          %700 = dma.vmem_to_hbm [thread:$0]  %s698, 16, %s695, %s666
        $region72: #{tpu_custom_call.1} parent=43 // pred_fallthru
          _
      $region44: #{tpu_custom_call.1} parent=5 // pred_fallthru
        _
      %p701 = scmp.le.s32.totalorder 2, %s29
      // Predicated region
      $region73: #{tpu_custom_call.1} parent=5 // pred_check
        %p702 = pneg %p701
      $region74: #{tpu_custom_call.1} parent=5 // pred_check_branch
        %704 = sbr.rel (%p702) target = $region76
      $region75: #{tpu_custom_call.1} parent=5 // pred_region
        %s705 = ssub.s32 %s29, 2
        // Predicated region
        $region77: #{tpu_custom_call.1} parent=75 // pred_check
          %p706 = pneg %p215
        $region78: #{tpu_custom_call.1} parent=75 // pred_check_branch
          %708 = sbr.rel (%p706) target = $region80
        $region79: #{tpu_custom_call.1} parent=75 // pred_region
          %s709 = sand.u32 %s200, 1
          %s710 = scalar_lea.sflag [#allocation5], %s709
          %s711 = sand.u32 %s200, 1
          %s712 = smul.addr %s711, 16
          %s713 = scalar_lea.vmem [#allocation13], %s712
          %714 = dma.done %s710, 256
        $region80: #{tpu_custom_call.1} parent=75 // pred_fallthru
          _
        // Predicated region
        $region81: #{tpu_custom_call.1} parent=75 // pred_check
          %p715 = pneg %p243
        $region82: #{tpu_custom_call.1} parent=75 // pred_check_branch
          %717 = sbr.rel (%p715) target = $region84
        $region83: #{tpu_custom_call.1} parent=75 // pred_region
          %s718 = sand.u32 %s228, 1
          %s719 = scalar_lea.sflag [#allocation15], %s718
          %s720 = sand.u32 %s228, 1
          %s721 = scalar_lea.vmem [#allocation14], %s720
          %722 = dma.done %s719, 16
        $region84: #{tpu_custom_call.1} parent=75 // pred_fallthru
          _
      $region76: #{tpu_custom_call.1} parent=5 // pred_fallthru
        _
    $region6: #{tpu_custom_call.1} parent=1 // loop_footer
      %s33 = sadd.s32 1, %s29
    $region7: #{tpu_custom_call.1} parent=1 // loop_footer_branch
      %28 = sbr.rel target = $region3
    $region8: #{tpu_custom_call.1} parent=1 // loop_exit
      _
    %723 = vsyncpa [#allocation4], 1
    %s724 = scalar_lea.sflag [#allocation4], 1
    %725 = vsyncpa %s724, 1
    %726 = vsyncpa [#allocation8], 1
    %727 = vsyncpa [#allocation12], 1
    %s728 = scalar_lea.sflag [#allocation12], 1
    %729 = vsyncpa %s728, 1
    %730 = vsyncpa [#allocation5], 1
    %s731 = scalar_lea.sflag [#allocation5], 1
    %732 = vsyncpa %s731, 1
    %733 = vsyncpa [#allocation15], 1
    %s734 = scalar_lea.sflag [#allocation15], 1
    %735 = vsyncpa %s734, 1
    %736 = vsyncpa [#allocation6], 1
    %s737 = scalar_lea.sflag [#allocation6], 1
    %738 = vsyncpa %s737, 1

</llo_original>
